<compile_context>
chip_gen: v7x
topology: tpu7x:2x2x1
jax: 0.10.0
libtpu: 0.0.40
codegen_flags: <defaults>
</compile_context>

<pallas_src>
import jax
import jax.numpy as jnp
from jax import lax
from jax.experimental import pallas as pl
from jax.experimental.pallas import tpu as pltpu


def _round_up(x, m):
    return ((x + m - 1) // m) * m


def _cel_kernel(logits_ref, target_ref, wt_ref, num_ref):
    """One batch tile -> partial numerator  sum_r w[t_r] * nll_r."""
    x = logits_ref[...]                                   # (TB, C) native dtype
    tgt = target_ref[...]                                 # (TB, 1) int32
    w_row = wt_ref[0]                                     # (1, TB) f32, lane-dense

    # numerically stable log-sum-exp: row max in native dtype (exact for bf16),
    # widen to f32 only at the exp / accumulate step
    m = jnp.max(x, axis=-1, keepdims=True)                                 # (TB, 1)
    e = jnp.exp(x.astype(jnp.float32) - m.astype(jnp.float32))             # (TB, C)
    lse = m.astype(jnp.float32) + jnp.log(jnp.sum(e, axis=-1, keepdims=True))

    # single one-hot select for the target logit (class-weight gather is done
    # outside the kernel now)
    col = lax.broadcasted_iota(jnp.int32, x.shape, 1)                      # (TB, C)
    onehot = col == tgt
    picked = jnp.sum(
        jnp.where(onehot, x, jnp.zeros_like(x)).astype(jnp.float32),
        axis=-1, keepdims=True)                                            # (TB, 1)

    nll = lse - picked                                                     # (TB, 1)

    # weighted row-sum on the (otherwise idle) MXU: (1, TB) @ (TB, 1) -> (1, 1).
    # w_row is zero for padded / ignored / out-of-range rows, so no masking
    # is needed here.
    num = jnp.dot(w_row, nll, preferred_element_type=jnp.float32)

    # full-vreg, unmasked store of the per-tile partial (reduced in the wrapper)
    num_ref[...] = jnp.full(num_ref.shape, num[0, 0], dtype=num_ref.dtype)


def cel_loss(logits, target, class_weights, *, tile_batch=None):
    """Weighted cross-entropy loss ('mean' reduction over weights), forward only.

    logits:        (N, C) float32 or bfloat16
    target:        (N,)   integer class indices in [0, C); out-of-range => ignored
    class_weights: (C,)   per-class weights
    """
    N, C = logits.shape
    itemsize = jnp.dtype(logits.dtype).itemsize

    if tile_batch is None:
        # Memory-bound kernel: tile size is the dominant lever.  Budget ~24 MiB
        # of VMEM working set per grid step, accounting for:
        #   * 2x double-buffered native-dtype logits tile,
        #   * ~3x TBxC f32 widened temporaries inside the kernel,
        #   * the lane-padded (TB, 1) targets block (pads to 128 lanes),
        # leaving headroom inside the 48 MiB scoped limit set below
        # (safe on v5e/v6e 128 MiB and under v7x's 64 MiB physical VMEM).
        budget = 24 * 1024 * 1024
        per_row = 2 * C * itemsize + 3 * C * 4 + 2 * 128 * 4 + 8
        tile_batch = budget // per_row
        tile_batch = int(max(16, min(tile_batch, 8192)))   # byte-based cap
    # never tile larger than the (padded) batch; keep rows a multiple of 16
    # (safe for both f32 (8) and bf16 (16) sublane packing)
    tile_batch = min(tile_batch, _round_up(N, 16))
    tile_batch = max(16, (tile_batch // 16) * 16)

    n_pad = _round_up(N, tile_batch)
    num_tiles = n_pad // tile_batch
    # keep >= 2 grid tiles when possible so a v7x megacore can split the batch
    # across both TensorCores under dimension_semantics=("parallel",)
    if num_tiles == 1 and tile_batch >= 32:
        tile_batch = max(16, ((tile_batch // 2) // 16) * 16)
        n_pad = _round_up(N, tile_batch)
        num_tiles = n_pad // tile_batch

    # ---- O(N) wrapper-side preprocessing (weight gather moved out of kernel) ----
    target_i = target.astype(jnp.int32)
    valid = (target_i >= 0) & (target_i < C)                 # invalid => ignored
    safe_t = jnp.clip(target_i, 0, C - 1)
    w_t = jnp.where(valid, class_weights.astype(jnp.float32)[safe_t], 0.0)
    den = jnp.sum(w_t)                                       # denominator, outside

    logits_p = logits
    if n_pad != N:
        logits_p = jnp.pad(logits, ((0, n_pad - N), (0, 0)))
        target_i = jnp.pad(target_i, (0, n_pad - N))
        w_t = jnp.pad(w_t, (0, n_pad - N))                   # padded rows: weight 0

    target_2d = target_i.reshape(n_pad, 1)
    w_tiles = w_t.reshape(num_tiles, 1, tile_batch)          # lane-dense per tile

    cost = pl.CostEstimate(
        flops=6 * N * C,
        transcendentals=N * C + N,                           # exp per elem + log per row
        bytes_accessed=n_pad * C * itemsize + n_pad * 8 + C * 4
        + num_tiles * 8 * 128 * 4,
    )

    num_p = pl.pallas_call(
        _cel_kernel,
        out_shape=jax.ShapeDtypeStruct((num_tiles, 8, 128), jnp.float32),
        grid_spec=pltpu.PrefetchScalarGridSpec(
            num_scalar_prefetch=0,
            grid=(num_tiles,),
            in_specs=[
                pl.BlockSpec((tile_batch, C), lambda i: (i, 0)),        # logits tile
                pl.BlockSpec((tile_batch, 1), lambda i: (i, 0)),        # targets tile
                pl.BlockSpec((1, 1, tile_batch), lambda i: (i, 0, 0)),  # w[t] tile (lane-dense)
            ],
            out_specs=pl.BlockSpec((1, 8, 128), lambda i: (i, 0, 0)),   # per-tile partial num
        ),
        compiler_params=pltpu.CompilerParams(
            # no cross-iteration accumulation -> fully parallel grid axis
            dimension_semantics=("parallel",),
            vmem_limit_bytes=48 * 1024 * 1024,
        ),
        cost_estimate=cost,
    )(logits_p, target_2d, w_tiles)

    # tiny final reduction over per-tile partials
    return jnp.sum(num_p[:, 0, 0]) / den


def _cel_reference(logits, target, class_weights):
    logp = jax.nn.log_softmax(logits.astype(jnp.float32), axis=-1)
    nll = -jnp.take_along_axis(logp, target[:, None].astype(jnp.int32), axis=-1)[:, 0]
    w = class_weights[target]
    return jnp.sum(w * nll) / jnp.sum(w)


if __name__ == "__main__":
    key = jax.random.PRNGKey(0)
    keys = jax.random.split(key, 9)

    # Test 1: small shapes consistent with CrossEntropyLoss: (N, C) logits + (N,) targets.
    N, C = 16, 128
    logits = jax.random.normal(keys[0], (N, C), dtype=jnp.float32)
    target = jax.random.randint(keys[1], (N,), 0, C, dtype=jnp.int32)
    class_weights = jax.random.uniform(keys[2], (C,), dtype=jnp.float32,
                                       minval=0.5, maxval=2.0)
    loss = jax.block_until_ready(cel_loss(logits, target, class_weights))
    ref = _cel_reference(logits, target, class_weights)
    assert jnp.allclose(loss, ref, rtol=1e-5, atol=1e-5), (loss, ref)

    # Test 2: N not divisible by the tile + C not a multiple of 128
    # (exercises padding + multi-tile parallel partials).
    N2, C2 = 40, 96
    logits2 = jax.random.normal(keys[3], (N2, C2), dtype=jnp.float32)
    target2 = jax.random.randint(keys[4], (N2,), 0, C2, dtype=jnp.int32)
    class_weights2 = jax.random.uniform(keys[5], (C2,), dtype=jnp.float32,
                                        minval=0.5, maxval=2.0)
    loss2 = jax.block_until_ready(
        cel_loss(logits2, target2, class_weights2, tile_batch=16))
    ref2 = _cel_reference(logits2, target2, class_weights2)
    assert jnp.allclose(loss2, ref2, rtol=1e-5, atol=1e-5), (loss2, ref2)

    # Test 3: bfloat16 logits, auto tile sizing, forced multi-tile (megacore split).
    N3, C3 = 300, 160
    logits3 = jax.random.normal(keys[6], (N3, C3), dtype=jnp.float32).astype(jnp.bfloat16)
    target3 = jax.random.randint(keys[7], (N3,), 0, C3, dtype=jnp.int32)
    class_weights3 = jax.random.uniform(keys[8], (C3,), dtype=jnp.float32,
                                        minval=0.5, maxval=2.0)
    loss3 = jax.block_until_ready(cel_loss(logits3, target3, class_weights3))
    ref3 = _cel_reference(logits3, target3, class_weights3)
    assert jnp.allclose(loss3, ref3, rtol=1e-4, atol=1e-4), (loss3, ref3)

    print("KERNEL_OK")
</pallas_src>

<mosaic_0001>
module attributes {stable_mosaic.version = 11 : i64} {
  func.func @_cel_kernel(%arg0: i32, %arg1: memref<16x128xf32, #tpu.memory_space<vmem>>, %arg2: memref<16x1xi32, #tpu.memory_space<vmem>>, %arg3: memref<1x1x16xf32, #tpu.memory_space<vmem>>, %arg4: memref<1x8x128xf32, #tpu.memory_space<vmem>>) attributes {dimension_semantics = [#tpu.dimension_semantics<parallel>], iteration_bounds = array<i64: 1>, scalar_prefetch = 0 : i64, scratch_operands = 0 : i64, tpu.core_type = #tpu.core_type<tc>, window_params = [{transform_indices = @transform_0, window_bounds = array<i64: 16, 128>}, {transform_indices = @transform_1, window_bounds = array<i64: 16, 1>}, {transform_indices = @transform_2, window_bounds = array<i64: 1, 1, 16>}, {transform_indices = @transform_3, window_bounds = array<i64: 1, 8, 128>}]} {
    %c0 = arith.constant 0 : index
    %c0_0 = arith.constant 0 : index
    %0 = vector.load %arg1[%c0, %c0_0] : memref<16x128xf32, #tpu.memory_space<vmem>>, vector<16x128xf32>
    %c0_1 = arith.constant 0 : index
    %c0_2 = arith.constant 0 : index
    %1 = vector.load %arg2[%c0_1, %c0_2] : memref<16x1xi32, #tpu.memory_space<vmem>>, vector<16x1xi32>
    %c0_3 = arith.constant 0 : index
    %c0_4 = arith.constant 0 : index
    %c0_5 = arith.constant 0 : index
    %2 = vector.load %arg3[%c0_3, %c0_4, %c0_5] : memref<1x1x16xf32, #tpu.memory_space<vmem>>, vector<1x1x16xf32>
    %3 = vector.shape_cast %2 : vector<1x1x16xf32> to vector<1x16xf32>
    %cst = arith.constant dense<0xFF800000> : vector<16xf32>
    %4 = vector.multi_reduction <maximumf>, %0, %cst [1] : vector<16x128xf32> to vector<16xf32>
    %5 = vector.shape_cast %4 : vector<16xf32> to vector<16x1xf32>
    %6 = vector.broadcast %5 : vector<16x1xf32> to vector<16x128xf32>
    %7 = arith.subf %0, %6 : vector<16x128xf32>
    %8 = math.exp %7 : vector<16x128xf32>
    %cst_6 = arith.constant dense<0.000000e+00> : vector<16xf32>
    %9 = vector.multi_reduction <add>, %8, %cst_6 [1] : vector<16x128xf32> to vector<16xf32>
    %10 = vector.shape_cast %9 : vector<16xf32> to vector<16x1xf32>
    %11 = math.log %10 : vector<16x1xf32>
    %12 = arith.addf %5, %11 : vector<16x1xf32>
    %13 = tpu.iota {dimensions = array<i32: 1>} : vector<16x128xi32>
    %14 = vector.broadcast %1 : vector<16x1xi32> to vector<16x128xi32>
    %15 = arith.cmpi eq, %13, %14 : vector<16x128xi32>
    %cst_7 = arith.constant 0.000000e+00 : f32
    %16 = vector.broadcast %cst_7 : f32 to vector<16x128xf32>
    %17 = arith.select %15, %0, %16 : vector<16x128xi1>, vector<16x128xf32>
    %cst_8 = arith.constant dense<0.000000e+00> : vector<16xf32>
    %18 = vector.multi_reduction <add>, %17, %cst_8 [1] : vector<16x128xf32> to vector<16xf32>
    %19 = vector.shape_cast %18 : vector<16xf32> to vector<16x1xf32>
    %20 = arith.subf %12, %19 : vector<16x1xf32>
    %cst_9 = arith.constant dense<0.000000e+00> : vector<1x1xf32>
    %21 = tpu.matmul %3, %20, %cst_9 {dimension_numbers = #tpu.dot_dimension_numbers<[1], [0], [0], [1], [0, 0, 1, 1], [], []>} : vector<1x16xf32>, vector<16x1xf32>, vector<1x1xf32> -> vector<1x1xf32>
    %22 = vector.extract %21[0, 0] : f32 from vector<1x1xf32>
    %23 = vector.broadcast %22 : f32 to vector<1x8x128xf32>
    %c0_10 = arith.constant 0 : index
    %c0_11 = arith.constant 0 : index
    %c0_12 = arith.constant 0 : index
    %24 = vector.load %arg4[%c0_10, %c0_11, %c0_12] : memref<1x8x128xf32, #tpu.memory_space<vmem>>, vector<1x8x128xf32>
    tpu.vector_store %arg4[%c0_10, %c0_11, %c0_12], %23 {strides = array<i32>} : memref<1x8x128xf32, #tpu.memory_space<vmem>>, vector<1x8x128xf32>,
    return
  }
  func.func @transform_0(%arg0: i32) -> (i32, i32) {
    %c0_i32 = arith.constant 0 : i32
    %c0_i32_0 = arith.constant 0 : i32
    return %arg0, %c0_i32 : i32, i32
  }
  func.func @transform_1(%arg0: i32) -> (i32, i32) {
    %c0_i32 = arith.constant 0 : i32
    %c0_i32_0 = arith.constant 0 : i32
    return %arg0, %c0_i32 : i32, i32
  }
  func.func @transform_2(%arg0: i32) -> (i32, i32, i32) {
    %c0_i32 = arith.constant 0 : i32
    %c0_i32_0 = arith.constant 0 : i32
    %c0_i32_1 = arith.constant 0 : i32
    return %arg0, %c0_i32, %c0_i32_0 : i32, i32, i32
  }
  func.func @transform_3(%arg0: i32) -> (i32, i32, i32) {
    %c0_i32 = arith.constant 0 : i32
    %c0_i32_0 = arith.constant 0 : i32
    %c0_i32_1 = arith.constant 0 : i32
    return %arg0, %c0_i32, %c0_i32_0 : i32, i32, i32
  }
}

</mosaic_0001>

<llo_original>
// kernel: tpu_custom_call.1
$region0: #{tpu_custom_call.1}
  #allocation0 [shape = 'u32[]', space=smem, size = 0x4, offset = 0x4, fixed_abs, tag = 'smem constant byte address 0x4 - core index']
  #allocation1 [shape = 'u32[144,128]{1,0:T(1,128)}', space=vmem, size = 0x12000, scoped, tag = 'internal scratch']
  %s0 = inlined_call_operand.vmem [shape: f32[16,128], index: 0, kind: input, shape index: {}]
  %s1 = inlined_call_operand.vmem [shape: s32[16,1], index: 1, kind: input, shape index: {}]
  %s2 = inlined_call_operand.vmem [shape: f32[1,1,16], index: 2, kind: input, shape index: {}]
  %s3 = inlined_call_operand.hbm [shape: f32[1,8,128], index: 3, kind: output, shape index: {}]
  %s4 = sld [smem:[#allocation0]]
  $region22: #{tpu_custom_call.1} parent=0
    _
  %s6 = ssub.s32 1, %s4
  %s7 = scalar_select 0, %s6, %s4
  $region1: #{tpu_custom_call.1} parent=0
    #allocation2 [shape = 'u8[4096]{0}', space=vmem, size = 0x1000, scoped, tag = 'output window, operand 0, single buffered']
    #allocation3 [shape = 's32[1]{0}', space=sflag, size = 0x4, scoped, tag = 'scoped memory for tpu_custom_call.1']
    %8 = vsyncpa [#allocation3], 0
    // Predicated region
    $region2: #{tpu_custom_call.1} parent=1 // pred_check
      _
    $region3: #{tpu_custom_call.1} parent=1 // pred_check_branch
      %10 = sbr.rel (0) target = $region5
    $region4: #{tpu_custom_call.1} parent=1 // pred_region
      _
    $region5: #{tpu_custom_call.1} parent=1 // pred_fallthru
      _
    // Predicated region
    $region6: #{tpu_custom_call.1} parent=1 // pred_check
      _
    $region7: #{tpu_custom_call.1} parent=1 // pred_check_branch
      %12 = sbr.rel (0) target = $region9
    $region8: #{tpu_custom_call.1} parent=1 // pred_region
      _
    $region9: #{tpu_custom_call.1} parent=1 // pred_fallthru
      _
    // Predicated region
    $region10: #{tpu_custom_call.1} parent=1 // pred_check
      _
    $region11: #{tpu_custom_call.1} parent=1 // pred_check_branch
      %14 = sbr.rel (0) target = $region13
    $region12: #{tpu_custom_call.1} parent=1 // pred_region
      _
    $region13: #{tpu_custom_call.1} parent=1 // pred_fallthru
      _
    %v15 = vld [vmem:[%s0] sm:$0xff]
    %v16 = vld [vmem:[%s0 + $0x8] sm:$0xff]
    %v17 = vld [vmem:[%s1] sm:$0xff]
    %v18 = vld [vmem:[%s1 + $0x8] sm:$0xff]
    %v19 = vld [vmem:[%s2] sm:$0x1]
    %20 = vmax.xlane.f32.xlu0 %v15
    %v21 = vpop.xlane.xlu0 %20
    %22 = vmax.xlane.f32.xlu0 %v16
    %v23 = vpop.xlane.xlu0 %22
    %v24 = vsub.f32 %v15, %v21
    %v25 = vsub.f32 %v16, %v23
    %v26 = vmul.f32 %v24, 1.442695
    %v27 = vpow.pop %v26
    %v28 = vmul.f32 %v25, 1.442695
    %v29 = vpow.pop %v28
    %30 = vadd.xlane.f32.xlu0 %v27
    %v31 = vpop.xlane.xlu0 %30
    %32 = vadd.xlane.f32.xlu0 %v29
    %v33 = vpop.xlane.xlu0 %32
    %v34 = vlog2.pop %v31
    %v35 = vmul.f32 %v34, 0.6931472
    %v36 = vlog2.pop %v33
    %v37 = vmul.f32 %v36, 0.6931472
    %v38 = vadd.f32 %v21, %v35
    %v39 = vadd.f32 %v23, %v37
    %v40 = vlaneseq
    %v41 = vand.u32 %v40, 127
    %42 = vset.pattern.permute.xlu0 0
    %43 = vperm.xlu0 %42, %v17
    %v44 = vpop.permute.xlu0 %43
    %45 = vset.pattern.permute.xlu0 0
    %46 = vperm.xlu0 %45, %v18
    %v47 = vpop.permute.xlu0 %46
    %vm48 = vcmp.eq.s32.totalorder %v41, %v44
    %vm49 = vcmp.eq.s32.totalorder %v41, %v47
    %v50 = vsel %vm48, %v15, 0.0
    %v51 = vsel %vm49, %v16, 0.0
    %52 = vadd.xlane.f32.xlu0 %v50
    %v53 = vpop.xlane.xlu0 %52
    %54 = vadd.xlane.f32.xlu0 %v51
    %v55 = vpop.xlane.xlu0 %54
    %v56 = vsub.f32 %v38, %v53
    %v57 = vsub.f32 %v39, %v55
    %vm58 = vcmask 130048
    %v60 = vsel %vm58, %v19, 0
    %62 = vmatprep.subr.mxu0 0.0
    %63 = vmatpush1.msra.mxu0 %v56
    %64 = vmatprep.subr.mxu0 0.0
    %65 = vmatpush1.msra.mxu0 %v57
    %66 = vmatprep.subr.mxu0 0.0
    %67 = vmatpush1.msra.mxu0 0.0
    %68 = vmatprep.subr.mxu0 0.0
    %69 = vmatpush1.msra.mxu0 0.0
    %70 = vmatprep.subr.mxu0 0.0
    %71 = vmatpush1.msra.mxu0 0.0
    %72 = vmatprep.subr.mxu0 0.0
    %73 = vmatpush1.msra.mxu0 0.0
    %74 = vmatprep.subr.mxu0 0.0
    %75 = vmatpush1.msra.mxu0 0.0
    %76 = vmatprep.subr.mxu0 0.0
    %77 = vmatpush1.msra.mxu0 0.0
    %78 = vmatprep.subr.mxu0 0.0
    %79 = vmatpush1.msra.mxu0 0.0
    %80 = vmatprep.subr.mxu0 0.0
    %81 = vmatpush1.msra.mxu0 0.0
    %82 = vmatprep.subr.mxu0 0.0
    %83 = vmatpush1.msra.mxu0 0.0
    %84 = vmatprep.subr.mxu0 0.0
    %85 = vmatpush1.msra.mxu0 0.0
    %86 = vmatprep.subr.mxu0 0.0
    %87 = vmatpush1.msra.mxu0 0.0
    %88 = vmatprep.subr.mxu0 0.0
    %89 = vmatpush1.msra.mxu0 0.0
    %90 = vmatprep.subr.mxu0 0.0
    %91 = vmatpush1.msra.mxu0 0.0
    %92 = vmatprep.subr.mxu0 0.0
    %93 = vmatpush1.msra.mxu0 0.0
    %94 = vmatprep.subr.mxu0 0.0
    %95 = vmatpush1.msra.mxu0 0.0
    %96 = vmatprep.subr.mxu0 0.0
    %97 = vmatpush1.msra.mxu0 0.0
    %98 = vmatprep.subr.mxu0 0.0
    %99 = vmatpush1.msra.mxu0 0.0
    %100 = vmatprep.subr.mxu0 0.0
    %101 = vmatpush1.msra.mxu0 0.0
    %102 = vmatprep.subr.mxu0 0.0
    %103 = vmatpush1.msra.mxu0 0.0
    %104 = vmatprep.subr.mxu0 0.0
    %105 = vmatpush1.msra.mxu0 0.0
    %106 = vmatprep.subr.mxu0 0.0
    %107 = vmatpush1.msra.mxu0 0.0
    %108 = vmatprep.subr.mxu0 0.0
    %109 = vmatpush1.msra.mxu0 0.0
    %110 = vmatprep.subr.mxu0 0.0
    %111 = vmatpush1.msra.mxu0 0.0
    %112 = vmatprep.subr.mxu0 0.0
    %113 = vmatpush1.msra.mxu0 0.0
    %114 = vmatprep.subr.mxu0 0.0
    %115 = vmatpush1.msra.mxu0 0.0
    %116 = vmatprep.subr.mxu0 0.0
    %117 = vmatpush1.msra.mxu0 0.0
    %118 = vmatprep.subr.mxu0 0.0
    %119 = vmatpush1.msra.mxu0 0.0
    %120 = vmatprep.subr.mxu0 0.0
    %121 = vmatpush1.msra.mxu0 0.0
    %122 = vmatprep.subr.mxu0 0.0
    %123 = vmatpush1.msra.mxu0 0.0
    %124 = vmatprep.subr.mxu0 0.0
    %125 = vmatpush1.msra.mxu0 0.0
    %126 = vmatprep.mubr.f32.mxu0 0.0
    %127 = vmatmul.mubr.f32.gmra.mrb[0].mxu0 %v60
    %v128 = vpop.f32.mrb[0].mxu0
    %v129 = vadd.f32 0.0, %v128
    %v130 = vpop.f32.mrb[0].mxu0
    %131 = vdwg.mxu0
    %s132 = vtos %v129
    %v133 = vstv %s132
    %134 = vst [vmem:[#allocation2] sm:$0xff] %v133
    // Predicated region
    $region14: #{tpu_custom_call.1} parent=1 // pred_check
      _
    $region15: #{tpu_custom_call.1} parent=1 // pred_check_branch
      %136 = sbr.rel (0) target = $region17
    $region16: #{tpu_custom_call.1} parent=1 // pred_region
      %s138 = ssub.s32 128, 128
      %139 = vsyncadd [#allocation3], %s138
      %s141 = sshll.u32 [#allocation2], 4
      %s142 = int_to_ptr.vmem [resolvable:$true] %s141
      %144 = dma.vmem_to_hbm [thread:$0]  %s142, 128, %s3, [#allocation3]
    $region17: #{tpu_custom_call.1} parent=1 // pred_fallthru
      _
    // Predicated region
    $region18: #{tpu_custom_call.1} parent=1 // pred_check
      _
    $region19: #{tpu_custom_call.1} parent=1 // pred_check_branch
      %146 = sbr.rel (0) target = $region21
    $region20: #{tpu_custom_call.1} parent=1 // pred_region
      %147 = dma.done [#allocation3], 128
    $region21: #{tpu_custom_call.1} parent=1 // pred_fallthru
      _
    %148 = vsyncpa [#allocation3], 1

</llo_original>
